<compile_context>
chip_gen: v7x
topology: tpu7x:2x2x1
jax: 0.10.0
libtpu: 0.0.40
codegen_flags: <defaults>
</compile_context>

<pallas_src>
import jax
import jax.numpy as jnp
from jax.experimental import pallas as pl
from jax.experimental.pallas import tpu as pltpu


def _editor_kernel(x_ref, w_ref, b_ref, o_ref):
    # x_ref: (1, C, TILE_P)    input pixels, lane-dense along TILE_P
    # w_ref: (2C+COUT, C)      [Wm^T ; Wi^T ; Wr^T] stacked row-wise (resident)
    # b_ref: (2C+COUT, 1)      [bm ; bi ; br] as a column (resident)
    # o_ref: (1, COUT, TILE_P)
    x = x_ref[0]                                   # (C, TILE_P)
    c = x.shape[0]
    cout = o_ref.shape[1]

    w = w_ref[...]
    b = b_ref[...]

    # solo: both 1x1 convs in ONE MXU matmul -> (2C, TILE_P).
    solo = jnp.dot(w[0:2 * c, :], x, preferred_element_type=jnp.float32)
    solo = solo + b[0:2 * c, :]                    # lane-broadcast bias add
    masks = jax.nn.sigmoid(solo[0:c, :])           # EUP
    images = solo[c:2 * c, :]
    fused = masks * images                         # (C, TILE_P), VPU

    # reconstructor: second MXU matmul.
    out = jnp.dot(w[2 * c:2 * c + cout, :], fused,
                  preferred_element_type=jnp.float32)
    out = out + b[2 * c:2 * c + cout, :]
    o_ref[0] = out.astype(o_ref.dtype)


def editor_forward(x_nchw, wm, bm, wi, bi, wr, br, *, tile_pixels=131072):
    """x_nchw: (N, C, H, W) float32. Returns (N, Cout, H, W)."""
    n, c, h, w_sp = x_nchw.shape
    cout = wr.shape[1]
    p = h * w_sp

    # NCHW is already (N, C, H*W) with pixels contiguous on the fast axis:
    # no transpose -- just a free reshape.
    x_flat = x_nchw.reshape(n, c, p)

    # Lane-dense pixel axis: zero-pad up to a multiple of 128 (padding flows
    # through sigmoid/mul harmlessly and is sliced off at the end).
    p_pad = ((p + 127) // 128) * 128
    if p_pad != p:
        x_flat = jnp.pad(x_flat, ((0, 0), (0, 0), (0, p_pad - p)))

    # Pack all six parameters into one weight slab + one bias column
    # (2 tiny resident VMEM inputs instead of 6).
    w_slab = jnp.concatenate(
        [jnp.transpose(wm), jnp.transpose(wi), jnp.transpose(wr)], axis=0)   # (2C+COUT, C)
    b_slab = jnp.concatenate(
        [bm.reshape(c, 1), bi.reshape(c, 1), br.reshape(cout, 1)], axis=0)   # (2C+COUT, 1)

    # Tile size: big (amortize per-step overhead) but VMEM-aware so the
    # double-buffered pipeline + live intermediates fit v7x's 64 MiB VMEM.
    vmem_budget = 24 * 1024 * 1024
    per_pixel_bytes = 4 * (2 * (c + cout)        # double-buffered in/out pipeline
                           + 3 * c + 2 * cout)   # peak live in-kernel intermediates
    max_tile = max(128, (vmem_budget // per_pixel_bytes) // 128 * 128)
    tile_p = max(128, (min(tile_pixels, p_pad, max_tile) // 128) * 128)

    # Keep >=2 parallel grid points so v7x's two TensorCores both get work.
    if n * pl.cdiv(p_pad, tile_p) < 2 and tile_p >= 256:
        tile_p = max(128, ((tile_p // 2) // 128) * 128)

    grid = (n, pl.cdiv(p_pad, tile_p))

    out_flat = pl.pallas_call(
        _editor_kernel,
        out_shape=jax.ShapeDtypeStruct((n, cout, p_pad), jnp.float32),
        grid_spec=pltpu.PrefetchScalarGridSpec(
            num_scalar_prefetch=0,
            grid=grid,
            in_specs=[
                pl.BlockSpec((1, c, tile_p), lambda b, pi: (b, 0, pi)),  # x tile
                pl.BlockSpec(w_slab.shape, lambda b, pi: (0, 0)),        # weight slab (resident)
                pl.BlockSpec(b_slab.shape, lambda b, pi: (0, 0)),        # bias column (resident)
            ],
            out_specs=pl.BlockSpec((1, cout, tile_p), lambda b, pi: (b, 0, pi)),
        ),
        compiler_params=pltpu.CompilerParams(
            # Both grid axes are independent -> shard across v7x's 2 TCs.
            dimension_semantics=("parallel", "parallel"),
            vmem_limit_bytes=32 * 1024 * 1024,
        ),
    )(x_flat, w_slab, b_slab)

    if p_pad != p:
        out_flat = out_flat[:, :, :p]
    # (N, COUT, H*W) -> NCHW: free reshape, no transpose.
    return out_flat.reshape(n, cout, h, w_sp)


def editor_reference(x_nchw, wm, bm, wi, bi, wr, br):
    """Pure-JAX reference of the same synthetic Editor forward."""
    n, c, h, w = x_nchw.shape
    xf = jnp.transpose(x_nchw, (0, 2, 3, 1)).reshape(-1, c)
    masks = jax.nn.sigmoid(xf @ wm + bm)
    images = xf @ wi + bi
    out = (masks * images) @ wr + br
    return jnp.transpose(out.reshape(n, h, w, -1), (0, 3, 1, 2))


if __name__ == "__main__":
    key = jax.random.PRNGKey(0)
    k_x, k_wm, k_bm, k_wi, k_bi, k_wr, k_br = jax.random.split(key, 7)

    N, C, H, W = 2, 4, 16, 16
    COUT = 4

    x = jax.random.normal(k_x, (N, C, H, W), dtype=jnp.float32)

    # Deterministic synthetic parameters (stand-ins for solo / reconstructor).
    wm = jax.random.normal(k_wm, (C, C), dtype=jnp.float32) * 0.1
    bm = jax.random.normal(k_bm, (1, C), dtype=jnp.float32) * 0.1
    wi = jax.random.normal(k_wi, (C, C), dtype=jnp.float32) * 0.1
    bi = jax.random.normal(k_bi, (1, C), dtype=jnp.float32) * 0.1
    wr = jax.random.normal(k_wr, (C, COUT), dtype=jnp.float32) * 0.1
    br = jax.random.normal(k_br, (1, COUT), dtype=jnp.float32) * 0.1

    out = editor_forward(x, wm, bm, wi, bi, wr, br)
    out = jax.block_until_ready(out)

    ref = editor_reference(x, wm, bm, wi, bi, wr, br)
    assert out.shape == (N, COUT, H, W), out.shape
    assert jnp.allclose(out, ref, atol=1e-5, rtol=1e-5), "mismatch vs reference"

    print("KERNEL_OK")
</pallas_src>

<mosaic_0001>
module attributes {stable_mosaic.version = 11 : i64} {
  func.func @_editor_kernel(%arg0: i32, %arg1: i32, %arg2: memref<1x4x256xf32, #tpu.memory_space<vmem>>, %arg3: memref<12x4xf32, #tpu.memory_space<vmem>>, %arg4: memref<12x1xf32, #tpu.memory_space<vmem>>, %arg5: memref<1x4x256xf32, #tpu.memory_space<vmem>>) attributes {dimension_semantics = [#tpu.dimension_semantics<parallel>, #tpu.dimension_semantics<parallel>], iteration_bounds = array<i64: 2, 1>, scalar_prefetch = 0 : i64, scratch_operands = 0 : i64, tpu.core_type = #tpu.core_type<tc>, window_params = [{transform_indices = @transform_0, window_bounds = array<i64: 1, 4, 256>}, {pipeline_mode = #tpu.pipeline_mode<synchronous>, transform_indices = @transform_1, window_bounds = array<i64: 12, 4>}, {pipeline_mode = #tpu.pipeline_mode<synchronous>, transform_indices = @transform_2, window_bounds = array<i64: 12, 1>}, {transform_indices = @transform_3, window_bounds = array<i64: 1, 4, 256>}]} {
    %c0 = arith.constant 0 : index
    %c0_0 = arith.constant 0 : index
    %c0_1 = arith.constant 0 : index
    %0 = vector.load %arg2[%c0, %c0_0, %c0_1] : memref<1x4x256xf32, #tpu.memory_space<vmem>>, vector<1x4x256xf32>
    %1 = vector.shape_cast %0 : vector<1x4x256xf32> to vector<4x256xf32>
    %c0_2 = arith.constant 0 : index
    %c0_3 = arith.constant 0 : index
    %2 = vector.load %arg3[%c0_2, %c0_3] : memref<12x4xf32, #tpu.memory_space<vmem>>, vector<12x4xf32>
    %c0_4 = arith.constant 0 : index
    %c0_5 = arith.constant 0 : index
    %3 = vector.load %arg4[%c0_4, %c0_5] : memref<12x1xf32, #tpu.memory_space<vmem>>, vector<12x1xf32>
    %4 = vector.extract_strided_slice %2 {offsets = [0, 0], sizes = [8, 4], strides = [1, 1]} : vector<12x4xf32> to vector<8x4xf32>
    %cst = arith.constant dense<0.000000e+00> : vector<8x256xf32>
    %5 = tpu.matmul %4, %1, %cst {dimension_numbers = #tpu.dot_dimension_numbers<[1], [0], [0], [1], [0, 0, 1, 1], [], []>} : vector<8x4xf32>, vector<4x256xf32>, vector<8x256xf32> -> vector<8x256xf32>
    %6 = vector.extract_strided_slice %3 {offsets = [0, 0], sizes = [8, 1], strides = [1, 1]} : vector<12x1xf32> to vector<8x1xf32>
    %7 = vector.broadcast %6 : vector<8x1xf32> to vector<8x256xf32>
    %8 = arith.addf %5, %7 : vector<8x256xf32>
    %9 = vector.extract_strided_slice %8 {offsets = [0, 0], sizes = [4, 256], strides = [1, 1]} : vector<8x256xf32> to vector<4x256xf32>
    %10 = arith.negf %9 : vector<4x256xf32>
    %11 = math.exp %10 : vector<4x256xf32>
    %cst_6 = arith.constant 1.000000e+00 : f32
    %12 = vector.broadcast %cst_6 : f32 to vector<4x256xf32>
    %13 = arith.addf %12, %11 : vector<4x256xf32>
    %14 = arith.divf %12, %13 : vector<4x256xf32>
    %15 = vector.extract_strided_slice %8 {offsets = [4, 0], sizes = [4, 256], strides = [1, 1]} : vector<8x256xf32> to vector<4x256xf32>
    %16 = arith.mulf %14, %15 : vector<4x256xf32>
    %17 = vector.extract_strided_slice %2 {offsets = [8, 0], sizes = [4, 4], strides = [1, 1]} : vector<12x4xf32> to vector<4x4xf32>
    %cst_7 = arith.constant dense<0.000000e+00> : vector<4x256xf32>
    %18 = tpu.matmul %17, %16, %cst_7 {dimension_numbers = #tpu.dot_dimension_numbers<[1], [0], [0], [1], [0, 0, 1, 1], [], []>} : vector<4x4xf32>, vector<4x256xf32>, vector<4x256xf32> -> vector<4x256xf32>
    %19 = vector.extract_strided_slice %3 {offsets = [8, 0], sizes = [4, 1], strides = [1, 1]} : vector<12x1xf32> to vector<4x1xf32>
    %20 = vector.broadcast %19 : vector<4x1xf32> to vector<4x256xf32>
    %21 = arith.addf %18, %20 : vector<4x256xf32>
    %c0_8 = arith.constant 0 : index
    %c0_9 = arith.constant 0 : index
    %c0_10 = arith.constant 0 : index
    %22 = vector.load %arg5[%c0_8, %c0_9, %c0_10] : memref<1x4x256xf32, #tpu.memory_space<vmem>>, vector<1x4x256xf32>
    %23 = vector.shape_cast %22 : vector<1x4x256xf32> to vector<4x256xf32>
    %24 = vector.shape_cast %21 : vector<4x256xf32> to vector<1x4x256xf32>
    tpu.vector_store %arg5[%c0_8, %c0_9, %c0_10], %24 {strides = array<i32>} : memref<1x4x256xf32, #tpu.memory_space<vmem>>, vector<1x4x256xf32>,
    return
  }
  func.func @transform_0(%arg0: i32, %arg1: i32) -> (i32, i32, i32) {
    %c0_i32 = arith.constant 0 : i32
    %c0_i32_0 = arith.constant 0 : i32
    return %arg0, %c0_i32, %arg1 : i32, i32, i32
  }
  func.func @transform_1(%arg0: i32, %arg1: i32) -> (i32, i32) {
    %c0_i32 = arith.constant 0 : i32
    %c0_i32_0 = arith.constant 0 : i32
    %c0_i32_1 = arith.constant 0 : i32
    return %c0_i32, %c0_i32_0 : i32, i32
  }
  func.func @transform_2(%arg0: i32, %arg1: i32) -> (i32, i32) {
    %c0_i32 = arith.constant 0 : i32
    %c0_i32_0 = arith.constant 0 : i32
    %c0_i32_1 = arith.constant 0 : i32
    return %c0_i32, %c0_i32_0 : i32, i32
  }
  func.func @transform_3(%arg0: i32, %arg1: i32) -> (i32, i32, i32) {
    %c0_i32 = arith.constant 0 : i32
    %c0_i32_0 = arith.constant 0 : i32
    return %arg0, %c0_i32, %arg1 : i32, i32, i32
  }
}

</mosaic_0001>

<llo_original>
// kernel: tpu_custom_call.1
$region0: #{tpu_custom_call.1}
  #allocation0 [shape = 'u32[]', space=smem, size = 0x4, offset = 0x4, fixed_abs, tag = 'smem constant byte address 0x4 - core index']
  #allocation1 [shape = 'u32[144,128]{1,0:T(1,128)}', space=vmem, size = 0x12000, scoped, tag = 'internal scratch']
  %s0 = inlined_call_operand.vmem [shape: f32[2,4,256], index: 0, kind: input, shape index: {}]
  %s1 = inlined_call_operand.vmem [shape: f32[12,4], index: 1, kind: input, shape index: {}]
  %s2 = inlined_call_operand.vmem [shape: f32[12,1], index: 2, kind: input, shape index: {}]
  %s3 = inlined_call_operand.hbm [shape: f32[2,4,256], index: 3, kind: output, shape index: {}]
  %s4 = sld [smem:[#allocation0]]
  $region45: #{tpu_custom_call.1} parent=0
    _
  %s6 = ssub.s32 1, %s4
  %s7 = scalar_select 0, %s6, %s4
  $region1: #{tpu_custom_call.1} parent=0
    #allocation2 [shape = 'u8[8192]{0}', space=vmem, size = 0x2000, scoped, tag = 'output window, operand 0']
    #allocation3 [shape = 's32[2]{0}', space=sflag, size = 0x8, scoped, tag = 'scoped memory for tpu_custom_call.1']
    %8 = vsyncpa [#allocation3], 0
    %s9 = scalar_lea.sflag [#allocation3], 1
    %10 = vsyncpa %s9, 0
    loop: start=0, step=1, limit=4
    $region2: #{tpu_custom_call.1} parent=1 // loop_pre_header
      _
    $region3: #{tpu_custom_call.1} parent=1 // loop_header
      %s12 = sphi 0, %s16
      %p13 = scmp.ge.s32.totalorder %s12, 4
      %s19 = sphi 0, %s31
      %s20 = sphi 0, %s27
      %s21 = sphi 0, %s19
      %s22 = sphi 0, %s20
      %s23 = sphi 0, %s21
      %s24 = sphi 0, %s22
      %s36 = sphi 0, %s38
      %s39 = sphi 0, %s36
      %s40 = sphi 0, %s39
      %s56 = sphi 0, %s40
      %s60 = sphi 0, %s60
      %s62 = sphi 0, %s60
      %s63 = sphi 0, %s62
      %s77 = sphi 0, %s63
      %s81 = sphi 0, %s81
      %s83 = sphi 0, %s81
      %s84 = sphi 0, %s83
      %s98 = sphi 0, %s84
      %s106 = sphi 0, %s108
      %s109 = sphi 0, %s106
      %s110 = sphi 0, %s109
      %s126 = sphi 0, %s110
    $region4: #{tpu_custom_call.1} parent=1 // loop_header_branch
      %15 = sbr.rel (%p13) target = $region8
    $region5: #{tpu_custom_call.1} parent=1 // loop_body
      %s17 = ssub.s32 %s12, 1
      %s18 = ssub.s32 %s12, 2
      %s25 = sadd.s32 1, %s20
      %p26 = scmp.ge.s32.totalorder %s25, 1
      %s27 = scalar_select %p26, 0, %s25
      %s28 = sadd.s32 1, %s19
      %s29 = scalar_select %p26, %s28, %s19
      %p30 = scmp.ge.s32.totalorder %s29, 2
      %s31 = scalar_select %p30, 0, %s29
      %s32 = ssub.s32 %s19, %s31
      %s33 = ssub.s32 %s20, %s27
      %s34 = sor.u32 %s32, %s33
      %p35 = scmp.eq.s32.totalorder %s34, 0
      %s37 = sadd.s32 %s36, 1
      %s38 = scalar_select %p35, %s36, %s37
      %p41 = pneg %p35
      %p42 = scmp.eq.s32.totalorder %s12, 1
      %p43 = por %p41, %p42
      %p44 = scmp.ne.s32.totalorder %s36, %s39
      %p45 = scmp.eq.s32.totalorder %s12, 0
      %p46 = por %p44, %p45
      %p47 = scmp.ne.s32.totalorder %s36, %s39
      %p48 = scmp.eq.s32.totalorder %s17, 1
      %p49 = por %p47, %p48
      %p50 = scmp.ne.s32.totalorder %s39, %s40
      %p51 = scmp.eq.s32.totalorder %s17, 0
      %p52 = por %p50, %p51
      %p53 = scmp.ne.s32.totalorder %s39, %s40
      %p54 = scmp.eq.s32.totalorder %s18, 1
      %p55 = por %p53, %p54
      %p57 = scmp.ne.s32.totalorder %s40, %s56
      %p58 = scmp.eq.s32.totalorder %s18, 0
      %p59 = por %p57, %p58
      %s61 = sadd.s32 %s60, 1
      %p64 = scmp.eq.s32.totalorder %s12, 1
      %p65 = scmp.ne.s32.totalorder %s60, %s62
      %p66 = scmp.eq.s32.totalorder %s12, 0
      %p67 = por %p65, %p66
      %p68 = scmp.ne.s32.totalorder %s60, %s62
      %p69 = scmp.eq.s32.totalorder %s17, 1
      %p70 = por %p68, %p69
      %p71 = scmp.ne.s32.totalorder %s62, %s63
      %p72 = scmp.eq.s32.totalorder %s17, 0
      %p73 = por %p71, %p72
      %p74 = scmp.ne.s32.totalorder %s62, %s63
      %p75 = scmp.eq.s32.totalorder %s18, 1
      %p76 = por %p74, %p75
      %p78 = scmp.ne.s32.totalorder %s63, %s77
      %p79 = scmp.eq.s32.totalorder %s18, 0
      %p80 = por %p78, %p79
      %s82 = sadd.s32 %s81, 1
      %p85 = scmp.eq.s32.totalorder %s12, 1
      %p86 = scmp.ne.s32.totalorder %s81, %s83
      %p87 = scmp.eq.s32.totalorder %s12, 0
      %p88 = por %p86, %p87
      %p89 = scmp.ne.s32.totalorder %s81, %s83
      %p90 = scmp.eq.s32.totalorder %s17, 1
      %p91 = por %p89, %p90
      %p92 = scmp.ne.s32.totalorder %s83, %s84
      %p93 = scmp.eq.s32.totalorder %s17, 0
      %p94 = por %p92, %p93
      %p95 = scmp.ne.s32.totalorder %s83, %s84
      %p96 = scmp.eq.s32.totalorder %s18, 1
      %p97 = por %p95, %p96
      %p99 = scmp.ne.s32.totalorder %s84, %s98
      %p100 = scmp.eq.s32.totalorder %s18, 0
      %p101 = por %p99, %p100
      %s102 = ssub.s32 %s19, %s31
      %s103 = ssub.s32 %s20, %s27
      %s104 = sor.u32 %s102, %s103
      %p105 = scmp.eq.s32.totalorder %s104, 0
      %s107 = sadd.s32 %s106, 1
      %s108 = scalar_select %p105, %s106, %s107
      %p111 = pneg %p105
      %p112 = scmp.eq.s32.totalorder %s12, 1
      %p113 = por %p111, %p112
      %p114 = scmp.ne.s32.totalorder %s106, %s109
      %p115 = scmp.eq.s32.totalorder %s12, 0
      %p116 = por %p114, %p115
      %p117 = scmp.ne.s32.totalorder %s106, %s109
      %p118 = scmp.eq.s32.totalorder %s17, 1
      %p119 = por %p117, %p118
      %p120 = scmp.ne.s32.totalorder %s109, %s110
      %p121 = scmp.eq.s32.totalorder %s17, 0
      %p122 = por %p120, %p121
      %p123 = scmp.ne.s32.totalorder %s109, %s110
      %p124 = scmp.eq.s32.totalorder %s18, 1
      %p125 = por %p123, %p124
      %p127 = scmp.ne.s32.totalorder %s110, %s126
      %p128 = scmp.eq.s32.totalorder %s18, 0
      %p129 = por %p127, %p128
      %p130 = scmp.le.s32.totalorder 1, %s12
      %p131 = scmp.lt.s32.totalorder %s12, 3
      %p132 = pnand %p130, %p131
      %p133 = pneg %p132
      // Predicated region
      $region9: #{tpu_custom_call.1} parent=5 // pred_check
        _
      $region10: #{tpu_custom_call.1} parent=5 // pred_check_branch
        %135 = sbr.rel (%p132) target = $region12
      $region11: #{tpu_custom_call.1} parent=5 // pred_region
        %s136 = ssub.s32 %s12, 1
        // Predicated region
        $region13: #{tpu_custom_call.1} parent=11 // pred_check
          %p137 = pneg %p73
        $region14: #{tpu_custom_call.1} parent=11 // pred_check_branch
          %139 = sbr.rel (%p137) target = $region16
        $region15: #{tpu_custom_call.1} parent=11 // pred_region
          _
        $region16: #{tpu_custom_call.1} parent=11 // pred_fallthru
          _
        // Predicated region
        $region17: #{tpu_custom_call.1} parent=11 // pred_check
          %p140 = pneg %p94
        $region18: #{tpu_custom_call.1} parent=11 // pred_check_branch
          %142 = sbr.rel (%p140) target = $region20
        $region19: #{tpu_custom_call.1} parent=11 // pred_region
          _
        $region20: #{tpu_custom_call.1} parent=11 // pred_fallthru
          _
      $region12: #{tpu_custom_call.1} parent=5 // pred_fallthru
        _
      %p143 = scmp.lt.s32.totalorder %s12, 2
      // Predicated region
      $region21: #{tpu_custom_call.1} parent=5 // pred_check
        %p144 = pneg %p143
      $region22: #{tpu_custom_call.1} parent=5 // pred_check_branch
        %146 = sbr.rel (%p144) target = $region24
      $region23: #{tpu_custom_call.1} parent=5 // pred_region
        // Predicated region
        $region25: #{tpu_custom_call.1} parent=23 // pred_check
          %p147 = pneg %p46
        $region26: #{tpu_custom_call.1} parent=23 // pred_check_branch
          %149 = sbr.rel (%p147) target = $region28
        $region27: #{tpu_custom_call.1} parent=23 // pred_region
          %s150 = smul.u32 2, %s20
          %p151 = scmp.lt.s32.totalorder %s19, 1
          %s152 = scalar_select %p151, %s19, 1
          %p153 = scmp.lt.s32.totalorder %s150, 1
          %s154 = scalar_select %p153, %s150, 1
          %s155 = smul.addr %s152, 2
          %s156 = sadd.s32 %s154, %s155
          %s157 = smul.addr %s156, 4
          %s158 = scalar_lea.vmem %s0, %s157
          %s159 = smul.u32 2, %s20
        $region28: #{tpu_custom_call.1} parent=23 // pred_fallthru
          _
      $region24: #{tpu_custom_call.1} parent=5 // pred_fallthru
        _
      %p160 = scmp.le.s32.totalorder 1, %s12
      %p161 = scmp.lt.s32.totalorder %s12, 3
      %p162 = pnand %p160, %p161
      %p163 = pneg %p162
      // Predicated region
      $region29: #{tpu_custom_call.1} parent=5 // pred_check
        _
      $region30: #{tpu_custom_call.1} parent=5 // pred_check_branch
        %165 = sbr.rel (%p162) target = $region32
      $region31: #{tpu_custom_call.1} parent=5 // pred_region
        %s166 = ssub.s32 %s12, 1
        %s167 = smul.u32 2, %s22
        %p168 = scmp.lt.s32.totalorder %s21, 1
        %s169 = scalar_select %p168, %s21, 1
        %p170 = scmp.lt.s32.totalorder %s167, 1
        %s171 = scalar_select %p170, %s167, 1
        %s172 = smul.addr %s169, 2
        %s173 = sadd.s32 %s171, %s172
        %s174 = smul.addr %s173, 4
        %s175 = scalar_lea.vmem %s0, %s174
        %p176 = pneg %p52
        %p177 = pneg %p49
        %p178 = pneg %p73
        %p179 = pneg %p70
        %p180 = pneg %p94
        %p181 = pneg %p91
        %p182 = pneg %p122
        %p183 = pneg %p119
        %s184 = sand.u32 %s109, 1
        %s185 = scalar_lea.sflag [#allocation3], %s184
        %s186 = sand.u32 %s109, 1
        %s187 = smul.addr %s186, 8
        %s188 = scalar_lea.vmem [#allocation2], %s187
        %s189 = smul.u32 2, %s22
        %p190 = scmp.lt.s32.totalorder %s21, 1
        %s191 = scalar_select %p190, %s21, 1
        %p192 = scmp.lt.s32.totalorder %s189, 1
        %s193 = scalar_select %p192, %s189, 1
        %s194 = smul.addr %s191, 2
        %s195 = sadd.s32 %s193, %s194
        %s196 = smul.addr %s195, 4
        %s197 = scalar_lea.vmem %s0, %s196
        %s198 = smul.u32 2, %s22
        %s199 = smul.u32 2, %s22
        %v200 = vld [vmem:[%s197] sm:$0xff]
        %v201 = vld [vmem:[%s1] sm:$0xff]
        %v202 = vld [vmem:[%s1 + $0x8] sm:$0xf]
        %v203 = vld [vmem:[%s2] sm:$0xff]
        %v204 = vld [vmem:[%s2 + $0x8] sm:$0xf]
        %206 = vset.pattern.permute.xlu0 0
        %207 = vperm.xlu0 %206, %v203
        %v208 = vpop.permute.xlu0 %207
        %v211 = vcombine.high %v200, %v200
        %vm212 = vcmask 31744
        %v214 = vsel %vm212, %v201, 0
        %vm216 = vcmask 1043456
        %v217 = vsel %vm216, %v200, 0
        %v219 = vsel %vm216, %v211, 0
        %221 = vmatprep.subr.mxu0 %v219
        %222 = vmatpush1.msra.mxu0 %v217
        %223 = vmatprep.subr.mxu0 0.0
        %224 = vmatpush1.msra.mxu0 0.0
        %225 = vmatprep.subr.mxu0 0.0
        %226 = vmatpush1.msra.mxu0 0.0
        %227 = vmatprep.subr.mxu0 0.0
        %228 = vmatpush1.msra.mxu0 0.0
        %229 = vmatprep.subr.mxu0 0.0
        %230 = vmatpush1.msra.mxu0 0.0
        %231 = vmatprep.subr.mxu0 0.0
        %232 = vmatpush1.msra.mxu0 0.0
        %233 = vmatprep.subr.mxu0 0.0
        %234 = vmatpush1.msra.mxu0 0.0
        %235 = vmatprep.subr.mxu0 0.0
        %236 = vmatpush1.msra.mxu0 0.0
        %237 = vmatprep.subr.mxu0 0.0
        %238 = vmatpush1.msra.mxu0 0.0
        %239 = vmatprep.subr.mxu0 0.0
        %240 = vmatpush1.msra.mxu0 0.0
        %241 = vmatprep.subr.mxu0 0.0
        %242 = vmatpush1.msra.mxu0 0.0
        %243 = vmatprep.subr.mxu0 0.0
        %244 = vmatpush1.msra.mxu0 0.0
        %245 = vmatprep.subr.mxu0 0.0
        %246 = vmatpush1.msra.mxu0 0.0
        %247 = vmatprep.subr.mxu0 0.0
        %248 = vmatpush1.msra.mxu0 0.0
        %249 = vmatprep.subr.mxu0 0.0
        %250 = vmatpush1.msra.mxu0 0.0
        %251 = vmatprep.subr.mxu0 0.0
        %252 = vmatpush1.msra.mxu0 0.0
        %253 = vmatprep.subr.mxu0 0.0
        %254 = vmatpush1.msra.mxu0 0.0
        %255 = vmatprep.subr.mxu0 0.0
        %256 = vmatpush1.msra.mxu0 0.0
        %257 = vmatprep.subr.mxu0 0.0
        %258 = vmatpush1.msra.mxu0 0.0
        %259 = vmatprep.subr.mxu0 0.0
        %260 = vmatpush1.msra.mxu0 0.0
        %261 = vmatprep.subr.mxu0 0.0
        %262 = vmatpush1.msra.mxu0 0.0
        %263 = vmatprep.subr.mxu0 0.0
        %264 = vmatpush1.msra.mxu0 0.0
        %265 = vmatprep.subr.mxu0 0.0
        %266 = vmatpush1.msra.mxu0 0.0
        %267 = vmatprep.subr.mxu0 0.0
        %268 = vmatpush1.msra.mxu0 0.0
        %269 = vmatprep.subr.mxu0 0.0
        %270 = vmatpush1.msra.mxu0 0.0
        %271 = vmatprep.subr.mxu0 0.0
        %272 = vmatpush1.msra.mxu0 0.0
        %273 = vmatprep.subr.mxu0 0.0
        %274 = vmatpush1.msra.mxu0 0.0
        %275 = vmatprep.subr.mxu0 0.0
        %276 = vmatpush1.msra.mxu0 0.0
        %277 = vmatprep.subr.mxu0 0.0
        %278 = vmatpush1.msra.mxu0 0.0
        %279 = vmatprep.subr.mxu0 0.0
        %280 = vmatpush1.msra.mxu0 0.0
        %281 = vmatprep.subr.mxu0 0.0
        %282 = vmatpush1.msra.mxu0 0.0
        %283 = vmatprep.subr.mxu0 0.0
        %284 = vmatpush1.msra.mxu0 0.0
        %285 = vmatprep.mubr.f32.mxu0 0.0
        %286 = vmatmul.mubr.f32.gmra.mrb[0].mxu0 %v214
        %v287 = vpop.f32.mrb[0].mxu0
        %v288 = vadd.f32 %v208, %v287
        %v289 = vpop.f32.mrb[0].mxu0
        %v290 = vadd.f32 %v208, %v289
        %291 = vdwg.mxu0
        %v292 = vxor.u32 %v288, 2147483648
        %v293 = vxor.u32 %v290, 2147483648
        %v294 = vmul.f32 %v292, 1.442695
        %v295 = vpow.pop %v294
        %v296 = vmul.f32 %v293, 1.442695
        %v297 = vpow.pop %v296
        %v298 = vadd.f32 %v295, 1.0
        %v299 = vadd.f32 %v297, 1.0
        %v300 = vrcp.pop %v298
        %v301 = vmul.f32 1.0, %v300
        %v302 = vrcp.pop %v299
        %v303 = vmul.f32 1.0, %v302
        %v306 = vrot.slane %v288, 4
        %v307 = vrot.slane %v290, 4
        %v310 = vmul.f32 %v301, %v306
        %v311 = vmul.f32 %v303, %v307
        %313 = vset.pattern.permute.xlu0 0
        %314 = vperm.xlu0 %313, %v204
        %v315 = vpop.permute.xlu0 %314
        %v318 = vsel %vm212, %v202, 0
        %v321 = vsel %vm216, %v310, 0
        %v324 = vsel %vm216, %v311, 0
        %326 = vmatprep.subr.mxu0 %v324
        %327 = vmatpush1.msra.mxu0 %v321
        %328 = vmatprep.subr.mxu0 0.0
        %329 = vmatpush1.msra.mxu0 0.0
        %330 = vmatprep.subr.mxu0 0.0
        %331 = vmatpush1.msra.mxu0 0.0
        %332 = vmatprep.subr.mxu0 0.0
        %333 = vmatpush1.msra.mxu0 0.0
        %334 = vmatprep.subr.mxu0 0.0
        %335 = vmatpush1.msra.mxu0 0.0
        %336 = vmatprep.subr.mxu0 0.0
        %337 = vmatpush1.msra.mxu0 0.0
        %338 = vmatprep.subr.mxu0 0.0
        %339 = vmatpush1.msra.mxu0 0.0
        %340 = vmatprep.subr.mxu0 0.0
        %341 = vmatpush1.msra.mxu0 0.0
        %342 = vmatprep.subr.mxu0 0.0
        %343 = vmatpush1.msra.mxu0 0.0
        %344 = vmatprep.subr.mxu0 0.0
        %345 = vmatpush1.msra.mxu0 0.0
        %346 = vmatprep.subr.mxu0 0.0
        %347 = vmatpush1.msra.mxu0 0.0
        %348 = vmatprep.subr.mxu0 0.0
        %349 = vmatpush1.msra.mxu0 0.0
        %350 = vmatprep.subr.mxu0 0.0
        %351 = vmatpush1.msra.mxu0 0.0
        %352 = vmatprep.subr.mxu0 0.0
        %353 = vmatpush1.msra.mxu0 0.0
        %354 = vmatprep.subr.mxu0 0.0
        %355 = vmatpush1.msra.mxu0 0.0
        %356 = vmatprep.subr.mxu0 0.0
        %357 = vmatpush1.msra.mxu0 0.0
        %358 = vmatprep.subr.mxu0 0.0
        %359 = vmatpush1.msra.mxu0 0.0
        %360 = vmatprep.subr.mxu0 0.0
        %361 = vmatpush1.msra.mxu0 0.0
        %362 = vmatprep.subr.mxu0 0.0
        %363 = vmatpush1.msra.mxu0 0.0
        %364 = vmatprep.subr.mxu0 0.0
        %365 = vmatpush1.msra.mxu0 0.0
        %366 = vmatprep.subr.mxu0 0.0
        %367 = vmatpush1.msra.mxu0 0.0
        %368 = vmatprep.subr.mxu0 0.0
        %369 = vmatpush1.msra.mxu0 0.0
        %370 = vmatprep.subr.mxu0 0.0
        %371 = vmatpush1.msra.mxu0 0.0
        %372 = vmatprep.subr.mxu0 0.0
        %373 = vmatpush1.msra.mxu0 0.0
        %374 = vmatprep.subr.mxu0 0.0
        %375 = vmatpush1.msra.mxu0 0.0
        %376 = vmatprep.subr.mxu0 0.0
        %377 = vmatpush1.msra.mxu0 0.0
        %378 = vmatprep.subr.mxu0 0.0
        %379 = vmatpush1.msra.mxu0 0.0
        %380 = vmatprep.subr.mxu0 0.0
        %381 = vmatpush1.msra.mxu0 0.0
        %382 = vmatprep.subr.mxu0 0.0
        %383 = vmatpush1.msra.mxu0 0.0
        %384 = vmatprep.subr.mxu0 0.0
        %385 = vmatpush1.msra.mxu0 0.0
        %386 = vmatprep.subr.mxu0 0.0
        %387 = vmatpush1.msra.mxu0 0.0
        %388 = vmatprep.subr.mxu0 0.0
        %389 = vmatpush1.msra.mxu0 0.0
        %390 = vmatprep.mubr.f32.mxu0 0.0
        %391 = vmatmul.mubr.f32.gmra.mrb[0].mxu0 %v318
        %v392 = vpop.f32.mrb[0].mxu0
        %v393 = vadd.f32 %v315, %v392
        %v394 = vpop.f32.mrb[0].mxu0
        %v395 = vadd.f32 %v315, %v394
        %396 = vdwg.mxu0
        %v399 = vcombine.low %v393, %v395
        %401 = vst [vmem:[%s188] sm:$0xff] %v399
        %s402 = sand.u32 %s109, 1
        %s403 = scalar_lea.sflag [#allocation3], %s402
        %s404 = sand.u32 %s109, 1
        %s405 = smul.addr %s404, 8
        %s406 = scalar_lea.vmem [#allocation2], %s405
        // Predicated region
        $region33: #{tpu_custom_call.1} parent=31 // pred_check
          %p407 = pneg %p119
        $region34: #{tpu_custom_call.1} parent=31 // pred_check_branch
          %409 = sbr.rel (%p407) target = $region36
        $region35: #{tpu_custom_call.1} parent=31 // pred_region
          %s410 = smul.u32 2, %s22
          %s412 = ssub.s32 128, 128
          %413 = vsyncadd %s403, %s412
          %s414 = smul.addr %s21, 2
          %s415 = sadd.s32 %s410, %s414
          %s416 = smul.addr %s415, 64
          %s417 = scalar_lea.hbm %s3, %s416
          %s419 = sshll.u32 %s406, 4
          %s420 = int_to_ptr.vmem [resolvable:$true] %s419
          %422 = dma.vmem_to_hbm [thread:$0]  %s420, 128, %s417, %s403
        $region36: #{tpu_custom_call.1} parent=31 // pred_fallthru
          _
      $region32: #{tpu_custom_call.1} parent=5 // pred_fallthru
        _
      %p423 = scmp.le.s32.totalorder 2, %s12
      // Predicated region
      $region37: #{tpu_custom_call.1} parent=5 // pred_check
        %p424 = pneg %p423
      $region38: #{tpu_custom_call.1} parent=5 // pred_check_branch
        %426 = sbr.rel (%p424) target = $region40
      $region39: #{tpu_custom_call.1} parent=5 // pred_region
        %s427 = ssub.s32 %s12, 2
        // Predicated region
        $region41: #{tpu_custom_call.1} parent=39 // pred_check
          %p428 = pneg %p125
        $region42: #{tpu_custom_call.1} parent=39 // pred_check_branch
          %430 = sbr.rel (%p428) target = $region44
        $region43: #{tpu_custom_call.1} parent=39 // pred_region
          %s431 = sand.u32 %s110, 1
          %s432 = scalar_lea.sflag [#allocation3], %s431
          %s433 = sand.u32 %s110, 1
          %s434 = smul.addr %s433, 8
          %s435 = scalar_lea.vmem [#allocation2], %s434
          %436 = dma.done %s432, 128
        $region44: #{tpu_custom_call.1} parent=39 // pred_fallthru
          _
      $region40: #{tpu_custom_call.1} parent=5 // pred_fallthru
        _
    $region6: #{tpu_custom_call.1} parent=1 // loop_footer
      %s16 = sadd.s32 1, %s12
    $region7: #{tpu_custom_call.1} parent=1 // loop_footer_branch
      %11 = sbr.rel target = $region3
    $region8: #{tpu_custom_call.1} parent=1 // loop_exit
      _
    %437 = vsyncpa [#allocation3], 1
    %s438 = scalar_lea.sflag [#allocation3], 1
    %439 = vsyncpa %s438, 1

</llo_original>
